<compile_context>
chip_gen: v7x
topology: tpu7x:2x2x1
jax: 0.10.0
libtpu: 0.0.40
codegen_flags: <defaults>
</compile_context>

<pallas_src>
import functools

import numpy as np
import jax
import jax.numpy as jnp
from jax import lax
from jax.experimental import pallas as pl
from jax.experimental.pallas import tpu as pltpu


def _round_up(x: int, m: int) -> int:
    return ((x + m - 1) // m) * m


def _vreg_bytes(shape, dt):
    """VMEM footprint of a 2-D buffer after (8,128) sublane/lane padding."""
    r, c = shape
    return _round_up(r, 8) * _round_up(c, 128) * jnp.dtype(dt).itemsize


# --------------------------------------------------------------------------- #
# Kernel
# --------------------------------------------------------------------------- #
def _rnn_kernel(x_ref, w_in_ref, b_in_ref, w_eff_ref, w_out_ref, b_out_ref,
                out_ref, *, time_steps: int):
    f32 = jnp.float32
    bf16 = jnp.bfloat16

    # In-kernel bf16 cast of x (VPU work hidden under the x DMA; avoids a
    # wrapper-side pad/cast HBM round trip -- the kernel is x-bandwidth bound
    # at large batch).
    x_bf = x_ref[...].astype(bf16)

    # Input projection, hoisted out of the recurrence (loop-invariant): one MXU
    # matmul for the whole batch tile.  Zero-padded W_in^T / b_in columns make
    # e_full exactly the [E, 0, 0] tensor of width Dp.
    e_full = (jnp.dot(x_bf, w_in_ref[...], preferred_element_type=f32)
              + b_in_ref[...])                          # [TB, Dp] f32

    w_eff = w_eff_ref[...]                              # [Dp, Dp] bf16, VMEM-resident

    def recur(state, add_e: bool):
        # One MXU matmul per timestep (bf16 operands, f32 accumulation).
        pre = jnp.dot(state.astype(w_eff.dtype), w_eff,
                      preferred_element_type=f32)
        if add_e:                                       # parity resolved at trace time
            pre = pre + e_full
        return jnp.maximum(pre, 0.0)                    # ReLU epilogue in f32

    if time_steps <= 0:
        state = jnp.zeros_like(e_full)
    else:
        # t = 0 peeled: state0 == 0, so step 0 is just relu(E) -- no MXU work.
        state = jnp.maximum(e_full, 0.0)
        remaining = time_steps - 1
        if remaining <= 7:
            # Full static unroll (default time_steps=2 lands here).
            for t in range(1, time_steps):
                state = recur(state, add_e=(t % 2 == 0))
        else:
            # Long horizons: (odd, even) step pairs in a fori_loop to cap code
            # size / vreg live ranges, then the static residue.
            n_pairs = remaining // 2

            def pair(_, s):
                s = recur(s, add_e=False)   # odd t: no E
                s = recur(s, add_e=True)    # even t: +E
                return s

            state = lax.fori_loop(0, n_pairs, pair, state, unroll=2)
            if remaining % 2 == 1:
                state = recur(state, add_e=False)       # final odd step

    # Fused output head: only the O-slice rows of w_out_ref are nonzero, so
    # this equals O_state @ W_out.T + b_out.  Lane-dense [TB, Cp] store.
    logits = (jnp.dot(state.astype(w_out_ref.dtype), w_out_ref[...],
                      preferred_element_type=f32)
              + b_out_ref[...])
    out_ref[...] = logits.astype(out_ref.dtype)


# --------------------------------------------------------------------------- #
# One-time weight staging (hoisted out of the per-call jit)
# --------------------------------------------------------------------------- #
def stage_weights(W_eff, W_in, b_in, W_out, b_out, dtype=jnp.bfloat16):
    """Zero-pad / transpose / cast the weights once.  Zero padding is
    numerically inert (relu(0)=0, zero rows/cols contribute 0)."""
    f32 = jnp.float32
    total_dim = W_eff.shape[0]
    sensory_dim, _input_dim = W_in.shape
    num_classes, output_dim = W_out.shape
    internal_dim = total_dim - sensory_dim - output_dim
    assert internal_dim >= 0

    Dp = _round_up(total_dim, 128)
    Cp = _round_up(num_classes, 128)
    o_start = sensory_dim + internal_dim

    w_in_p = (jnp.zeros((W_in.shape[1], Dp), dtype)
              .at[:, :sensory_dim].set(W_in.T.astype(dtype)))
    b_in_p = jnp.zeros((1, Dp), f32).at[0, :sensory_dim].set(b_in.astype(f32))
    w_eff_p = (jnp.zeros((Dp, Dp), dtype)
               .at[:total_dim, :total_dim].set(W_eff.astype(dtype)))
    w_out_p = (jnp.zeros((Dp, Cp), dtype)
               .at[o_start:o_start + output_dim, :num_classes]
               .set(W_out.T.astype(dtype)))
    b_out_p = jnp.zeros((1, Cp), f32).at[0, :num_classes].set(b_out.astype(f32))
    return w_in_p, b_in_p, w_eff_p, w_out_p, b_out_p


# --------------------------------------------------------------------------- #
# Forward (jitted; takes pre-staged weights)
# --------------------------------------------------------------------------- #
@functools.partial(jax.jit,
                   static_argnames=("num_classes", "time_steps", "tb_max"))
def basic_rnn_forward(x, w_in_p, b_in_p, w_eff_p, w_out_p, b_out_p, *,
                      num_classes, time_steps=2, tb_max=256):
    """x: [B, ...] (flattened internally).  Staged weights from stage_weights()."""
    f32 = jnp.float32

    B = x.shape[0]
    x2 = x.reshape(B, -1).astype(f32)          # metadata reshape; cast to bf16 in-kernel
    input_dim = x2.shape[1]
    assert input_dim == w_in_p.shape[0]
    Dp = w_eff_p.shape[0]
    Cp = w_out_p.shape[1]

    # Batch tiling: small batches run as one full-extent block (no padding);
    # large batches use TB=256 (v6e/v7x 256-wide MXU, amortizes per-step grid
    # overhead).  A trailing partial block is handled by Pallas (masked store).
    TB = B if B <= tb_max else tb_max
    grid = (pl.cdiv(B, TB),)

    const = lambda b: (0, 0)   # weights/biases: constant block index -> loaded once

    # Honest VMEM budget: ~2x working set (inputs/outputs double-buffered by
    # the default pipeline), small floor for compiler temporaries, clamped
    # below v7x's 64 MiB physical VMEM.
    vmem_need = (
        2 * _vreg_bytes((TB, input_dim), f32)              # x tile
        + 2 * _vreg_bytes((input_dim, Dp), w_in_p.dtype)   # W_in^T
        + 2 * _vreg_bytes((1, Dp), f32)                    # b_in
        + 2 * _vreg_bytes((Dp, Dp), w_eff_p.dtype)         # W_eff
        + 2 * _vreg_bytes((Dp, Cp), w_out_p.dtype)         # output head
        + 2 * _vreg_bytes((1, Cp), f32)                    # b_out
        + 2 * _vreg_bytes((TB, Cp), f32)                   # logits tile
        + _vreg_bytes((TB, input_dim), jnp.bfloat16)       # in-kernel x cast
        + 6 * _vreg_bytes((TB, Dp), f32)                   # e_full/state/pre + headroom
    )
    vmem_limit = int(min(max(2 * vmem_need, 4 * 1024 * 1024), 56 * 1024 * 1024))

    kernel = functools.partial(_rnn_kernel, time_steps=int(time_steps))

    out_p = pl.pallas_call(
        kernel,
        out_shape=jax.ShapeDtypeStruct((B, Cp), f32),
        grid_spec=pltpu.PrefetchScalarGridSpec(
            num_scalar_prefetch=0,
            grid=grid,
            in_specs=[
                pl.BlockSpec((TB, input_dim), lambda b: (b, 0)),  # x tile (per batch block)
                pl.BlockSpec((input_dim, Dp), const),             # W_in^T (padded cols)
                pl.BlockSpec((1, Dp), const),                     # b_in   (padded)
                pl.BlockSpec((Dp, Dp), const),                    # W_eff  (padded, resident)
                pl.BlockSpec((Dp, Cp), const),                    # output head (padded)
                pl.BlockSpec((1, Cp), const),                     # b_out  (padded)
            ],
            out_specs=pl.BlockSpec((TB, Cp), lambda b: (b, 0)),
        ),
        compiler_params=pltpu.CompilerParams(
            dimension_semantics=("parallel",),   # batch tiles independent (v7x: 2 TCs)
            vmem_limit_bytes=vmem_limit,
        ),
    )(x2, w_in_p, b_in_p, w_eff_p, w_out_p, b_out_p)

    return out_p[:, :num_classes]


# --------------------------------------------------------------------------- #
# Pure-JAX reference (mirrors torch forward; same bf16 staging as the kernel)
# --------------------------------------------------------------------------- #
def basic_rnn_reference(x, W_eff, W_in, b_in, W_out, b_out, *, time_steps=2):
    bf16, f32 = jnp.bfloat16, jnp.float32
    B = x.shape[0]
    x2 = x.reshape(B, -1).astype(bf16)
    sensory_dim = W_in.shape[0]
    num_classes, output_dim = W_out.shape
    total_dim = W_eff.shape[0]
    internal_dim = total_dim - sensory_dim - output_dim

    E = jnp.dot(x2, W_in.T.astype(bf16), preferred_element_type=f32) + b_in.astype(f32)
    state = jnp.zeros((B, total_dim), f32)
    Wb = W_eff.astype(bf16)
    for t in range(time_steps):
        pre = jnp.dot(state.astype(bf16), Wb, preferred_element_type=f32)
        if t % 2 == 0:
            pre = pre.at[:, :sensory_dim].add(E)
        state = jnp.maximum(pre, 0.0)
    o_state = state[:, sensory_dim + internal_dim:]
    return (jnp.dot(o_state.astype(bf16), W_out.T.astype(bf16),
                    preferred_element_type=f32) + b_out.astype(f32))


if __name__ == "__main__":
    key = jax.random.PRNGKey(0)

    # Small shapes consistent with the module: forward() flattens x.view(B, -1);
    # time_steps=2 is the torch default (exercises both E_t parities).
    batch, channels, spatial = 2, 4, 16
    input_dim = channels * spatial * spatial              # 1024
    sensory_dim, internal_dim, output_dim = 32, 48, 24
    total_dim = sensory_dim + internal_dim + output_dim   # 104
    num_classes = 10

    k = jax.random.split(key, 7)
    x = jax.random.normal(k[0], (batch, channels, spatial, spatial), jnp.float32)
    # W_init analogue: sparse-ish recurrent matrix (use_lora=False => W_eff == W).
    W = jax.random.normal(k[1], (total_dim, total_dim), jnp.float32) * 0.05
    W = jnp.where(jax.random.uniform(k[2], W.shape) < 0.5, W, 0.0)
    W_in = jax.random.normal(k[3], (sensory_dim, input_dim), jnp.float32) * 0.02
    b_in = jax.random.normal(k[4], (sensory_dim,), jnp.float32) * 0.1
    W_out = jax.random.normal(k[5], (num_classes, output_dim), jnp.float32) * 0.1
    b_out = jax.random.normal(k[6], (num_classes,), jnp.float32) * 0.1

    # Stage (pad / transpose / cast) the weights ONCE, outside the forward jit.
    staged = jax.block_until_ready(stage_weights(W, W_in, b_in, W_out, b_out))

    # time_steps = 2 (default): peeled t=0 (+E) then one recurrence step (no E).
    logits = jax.block_until_ready(
        basic_rnn_forward(x, *staged, num_classes=num_classes, time_steps=2))
    ref = jax.block_until_ready(
        basic_rnn_reference(x, W, W_in, b_in, W_out, b_out, time_steps=2))
    np.testing.assert_allclose(np.asarray(logits), np.asarray(ref),
                               rtol=1e-2, atol=1e-2)

    # time_steps = 3: exercises the peel + an even (+E) step after an odd one.
    logits3 = jax.block_until_ready(
        basic_rnn_forward(x, *staged, num_classes=num_classes, time_steps=3))
    ref3 = jax.block_until_ready(
        basic_rnn_reference(x, W, W_in, b_in, W_out, b_out, time_steps=3))
    np.testing.assert_allclose(np.asarray(logits3), np.asarray(ref3),
                               rtol=1e-2, atol=1e-2)

    print("KERNEL_OK")
</pallas_src>

<mosaic_0001>
module attributes {stable_mosaic.version = 11 : i64} {
  func.func @_rnn_kernel(%arg0: i32, %arg1: memref<2x1024xf32, #tpu.memory_space<vmem>>, %arg2: memref<1024x128xbf16, #tpu.memory_space<vmem>>, %arg3: memref<1x128xf32, #tpu.memory_space<vmem>>, %arg4: memref<128x128xbf16, #tpu.memory_space<vmem>>, %arg5: memref<128x128xbf16, #tpu.memory_space<vmem>>, %arg6: memref<1x128xf32, #tpu.memory_space<vmem>>, %arg7: memref<2x128xf32, #tpu.memory_space<vmem>>) attributes {dimension_semantics = [#tpu.dimension_semantics<parallel>], iteration_bounds = array<i64: 1>, scalar_prefetch = 0 : i64, scratch_operands = 0 : i64, tpu.core_type = #tpu.core_type<tc>, window_params = [{transform_indices = @transform_0, window_bounds = array<i64: 2, 1024>}, {pipeline_mode = #tpu.pipeline_mode<synchronous>, transform_indices = @transform_1, window_bounds = array<i64: 1024, 128>}, {pipeline_mode = #tpu.pipeline_mode<synchronous>, transform_indices = @transform_2, window_bounds = array<i64: 1, 128>}, {pipeline_mode = #tpu.pipeline_mode<synchronous>, transform_indices = @transform_3, window_bounds = array<i64: 128, 128>}, {pipeline_mode = #tpu.pipeline_mode<synchronous>, transform_indices = @transform_4, window_bounds = array<i64: 128, 128>}, {pipeline_mode = #tpu.pipeline_mode<synchronous>, transform_indices = @transform_5, window_bounds = array<i64: 1, 128>}, {transform_indices = @transform_6, window_bounds = array<i64: 2, 128>}]} {
    %c0 = arith.constant 0 : index
    %c0_0 = arith.constant 0 : index
    %0 = vector.load %arg1[%c0, %c0_0] : memref<2x1024xf32, #tpu.memory_space<vmem>>, vector<2x1024xf32>
    %1 = arith.truncf %0 : vector<2x1024xf32> to vector<2x1024xbf16>
    %c0_1 = arith.constant 0 : index
    %c0_2 = arith.constant 0 : index
    %2 = vector.load %arg2[%c0_1, %c0_2] : memref<1024x128xbf16, #tpu.memory_space<vmem>>, vector<1024x128xbf16>
    %cst = arith.constant dense<0.000000e+00> : vector<2x128xf32>
    %3 = tpu.matmul %1, %2, %cst {dimension_numbers = #tpu.dot_dimension_numbers<[1], [0], [0], [1], [0, 0, 1, 1], [], []>} : vector<2x1024xbf16>, vector<1024x128xbf16>, vector<2x128xf32> -> vector<2x128xf32>
    %c0_3 = arith.constant 0 : index
    %c0_4 = arith.constant 0 : index
    %4 = vector.load %arg3[%c0_3, %c0_4] : memref<1x128xf32, #tpu.memory_space<vmem>>, vector<1x128xf32>
    %5 = vector.broadcast %4 : vector<1x128xf32> to vector<2x128xf32>
    %6 = arith.addf %3, %5 : vector<2x128xf32>
    %c0_5 = arith.constant 0 : index
    %c0_6 = arith.constant 0 : index
    %7 = vector.load %arg4[%c0_5, %c0_6] : memref<128x128xbf16, #tpu.memory_space<vmem>>, vector<128x128xbf16>
    %cst_7 = arith.constant 0.000000e+00 : f32
    %8 = vector.broadcast %cst_7 : f32 to vector<2x128xf32>
    %9 = arith.maximumf %6, %8 : vector<2x128xf32>
    %10 = arith.truncf %9 : vector<2x128xf32> to vector<2x128xbf16>
    %cst_8 = arith.constant dense<0.000000e+00> : vector<2x128xf32>
    %11 = tpu.matmul %10, %7, %cst_8 {dimension_numbers = #tpu.dot_dimension_numbers<[1], [0], [0], [1], [0, 0, 1, 1], [], []>} : vector<2x128xbf16>, vector<128x128xbf16>, vector<2x128xf32> -> vector<2x128xf32>
    %cst_9 = arith.constant 0.000000e+00 : f32
    %12 = vector.broadcast %cst_9 : f32 to vector<2x128xf32>
    %13 = arith.maximumf %11, %12 : vector<2x128xf32>
    %14 = arith.truncf %13 : vector<2x128xf32> to vector<2x128xbf16>
    %c0_10 = arith.constant 0 : index
    %c0_11 = arith.constant 0 : index
    %15 = vector.load %arg5[%c0_10, %c0_11] : memref<128x128xbf16, #tpu.memory_space<vmem>>, vector<128x128xbf16>
    %cst_12 = arith.constant dense<0.000000e+00> : vector<2x128xf32>
    %16 = tpu.matmul %14, %15, %cst_12 {dimension_numbers = #tpu.dot_dimension_numbers<[1], [0], [0], [1], [0, 0, 1, 1], [], []>} : vector<2x128xbf16>, vector<128x128xbf16>, vector<2x128xf32> -> vector<2x128xf32>
    %c0_13 = arith.constant 0 : index
    %c0_14 = arith.constant 0 : index
    %17 = vector.load %arg6[%c0_13, %c0_14] : memref<1x128xf32, #tpu.memory_space<vmem>>, vector<1x128xf32>
    %18 = vector.broadcast %17 : vector<1x128xf32> to vector<2x128xf32>
    %19 = arith.addf %16, %18 : vector<2x128xf32>
    %c0_15 = arith.constant 0 : index
    %c0_16 = arith.constant 0 : index
    %20 = vector.load %arg7[%c0_15, %c0_16] : memref<2x128xf32, #tpu.memory_space<vmem>>, vector<2x128xf32>
    tpu.vector_store %arg7[%c0_15, %c0_16], %19 {strides = array<i32>} : memref<2x128xf32, #tpu.memory_space<vmem>>, vector<2x128xf32>,
    return
  }
  func.func @transform_0(%arg0: i32) -> (i32, i32) {
    %c0_i32 = arith.constant 0 : i32
    %c0_i32_0 = arith.constant 0 : i32
    return %arg0, %c0_i32 : i32, i32
  }
  func.func @transform_1(%arg0: i32) -> (i32, i32) {
    %c0_i32 = arith.constant 0 : i32
    %c0_i32_0 = arith.constant 0 : i32
    %c0_i32_1 = arith.constant 0 : i32
    return %c0_i32, %c0_i32_0 : i32, i32
  }
  func.func @transform_2(%arg0: i32) -> (i32, i32) {
    %c0_i32 = arith.constant 0 : i32
    %c0_i32_0 = arith.constant 0 : i32
    %c0_i32_1 = arith.constant 0 : i32
    return %c0_i32, %c0_i32_0 : i32, i32
  }
  func.func @transform_3(%arg0: i32) -> (i32, i32) {
    %c0_i32 = arith.constant 0 : i32
    %c0_i32_0 = arith.constant 0 : i32
    %c0_i32_1 = arith.constant 0 : i32
    return %c0_i32, %c0_i32_0 : i32, i32
  }
  func.func @transform_4(%arg0: i32) -> (i32, i32) {
    %c0_i32 = arith.constant 0 : i32
    %c0_i32_0 = arith.constant 0 : i32
    %c0_i32_1 = arith.constant 0 : i32
    return %c0_i32, %c0_i32_0 : i32, i32
  }
  func.func @transform_5(%arg0: i32) -> (i32, i32) {
    %c0_i32 = arith.constant 0 : i32
    %c0_i32_0 = arith.constant 0 : i32
    %c0_i32_1 = arith.constant 0 : i32
    return %c0_i32, %c0_i32_0 : i32, i32
  }
  func.func @transform_6(%arg0: i32) -> (i32, i32) {
    %c0_i32 = arith.constant 0 : i32
    %c0_i32_0 = arith.constant 0 : i32
    return %arg0, %c0_i32 : i32, i32
  }
}

</mosaic_0001>

<llo_original>
// kernel: basic_rnn_forward.1
$region0: #{basic_rnn_forward.1}
  #allocation0 [shape = 'u32[]', space=smem, size = 0x4, offset = 0x4, fixed_abs, tag = 'smem constant byte address 0x4 - core index']
  #allocation1 [shape = 'u32[144,128]{1,0:T(1,128)}', space=vmem, size = 0x12000, scoped, tag = 'internal scratch']
  %s0 = inlined_call_operand.vmem [shape: f32[2,1024], index: 0, kind: input, shape index: {}]
  %s1 = inlined_call_operand.hbm [shape: bf16[1024,128], index: 1, kind: input, shape index: {}]
  %s2 = inlined_call_operand.vmem [shape: f32[1,128], index: 2, kind: input, shape index: {}]
  %s3 = inlined_call_operand.vmem [shape: bf16[128,128], index: 3, kind: input, shape index: {}]
  %s4 = inlined_call_operand.vmem [shape: bf16[128,128], index: 4, kind: input, shape index: {}]
  %s5 = inlined_call_operand.vmem [shape: f32[1,128], index: 5, kind: input, shape index: {}]
  %s6 = inlined_call_operand.hbm [shape: f32[2,128], index: 6, kind: output, shape index: {}]
  %s7 = sld [smem:[#allocation0]]
  $region38: #{basic_rnn_forward.1} parent=0
    _
  %s9 = ssub.s32 1, %s7
  %s10 = scalar_select 0, %s9, %s7
  $region1: #{basic_rnn_forward.1} parent=0
    #allocation2 [shape = 'u8[262144]{0}', space=vmem, size = 0x40000, scoped, tag = 'input window, operand 1, single buffered']
    #allocation3 [shape = 's32[1]{0}', space=sflag, size = 0x4, scoped, tag = 'scoped memory for basic_rnn_forward.1']
    #allocation4 [shape = 's32[1]{0}', space=sflag, size = 0x4, scoped, tag = 'scoped memory for basic_rnn_forward.1']
    #allocation5 [shape = 'u8[1024]{0}', space=vmem, size = 0x400, scoped, tag = 'output window, operand 0, single buffered']
    %11 = vsyncpa [#allocation3], 0
    %12 = vsyncpa [#allocation4], 0
    // Predicated region
    $region2: #{basic_rnn_forward.1} parent=1 // pred_check
      _
    $region3: #{basic_rnn_forward.1} parent=1 // pred_check_branch
      %14 = sbr.rel (0) target = $region5
    $region4: #{basic_rnn_forward.1} parent=1 // pred_region
      _
    $region5: #{basic_rnn_forward.1} parent=1 // pred_fallthru
      _
    // Predicated region
    $region6: #{basic_rnn_forward.1} parent=1 // pred_check
      _
    $region7: #{basic_rnn_forward.1} parent=1 // pred_check_branch
      %16 = sbr.rel (0) target = $region9
    $region8: #{basic_rnn_forward.1} parent=1 // pred_region
      %s18 = ssub.s32 8192, 8192
      %19 = vsyncadd [#allocation3], %s18
      %s20 = sshll.u32 [#allocation2], 4
      %s21 = int_to_ptr.vmem [resolvable:$true] %s20
      %26 = dma.hbm_to_vmem [thread:$0]  %s1, 8192, %s21, [#allocation3], 64, 64, 4
    $region9: #{basic_rnn_forward.1} parent=1 // pred_fallthru
      _
    // Predicated region
    $region10: #{basic_rnn_forward.1} parent=1 // pred_check
      _
    $region11: #{basic_rnn_forward.1} parent=1 // pred_check_branch
      %28 = sbr.rel (0) target = $region13
    $region12: #{basic_rnn_forward.1} parent=1 // pred_region
      _
    $region13: #{basic_rnn_forward.1} parent=1 // pred_fallthru
      _
    // Predicated region
    $region14: #{basic_rnn_forward.1} parent=1 // pred_check
      _
    $region15: #{basic_rnn_forward.1} parent=1 // pred_check_branch
      %30 = sbr.rel (0) target = $region17
    $region16: #{basic_rnn_forward.1} parent=1 // pred_region
      _
    $region17: #{basic_rnn_forward.1} parent=1 // pred_fallthru
      _
    // Predicated region
    $region18: #{basic_rnn_forward.1} parent=1 // pred_check
      _
    $region19: #{basic_rnn_forward.1} parent=1 // pred_check_branch
      %32 = sbr.rel (0) target = $region21
    $region20: #{basic_rnn_forward.1} parent=1 // pred_region
      _
    $region21: #{basic_rnn_forward.1} parent=1 // pred_fallthru
      _
    // Predicated region
    $region22: #{basic_rnn_forward.1} parent=1 // pred_check
      _
    $region23: #{basic_rnn_forward.1} parent=1 // pred_check_branch
      %34 = sbr.rel (0) target = $region25
    $region24: #{basic_rnn_forward.1} parent=1 // pred_region
      _
    $region25: #{basic_rnn_forward.1} parent=1 // pred_fallthru
      _
    // Predicated region
    $region26: #{basic_rnn_forward.1} parent=1 // pred_check
      _
    $region27: #{basic_rnn_forward.1} parent=1 // pred_check_branch
      %36 = sbr.rel (0) target = $region29
    $region28: #{basic_rnn_forward.1} parent=1 // pred_region
      %37 = dma.done [#allocation3], 8192
    $region29: #{basic_rnn_forward.1} parent=1 // pred_fallthru
      _
    %v39 = vld [vmem:[%s0] sm:$0xff]
    %v40 = vld [vmem:[%s0 + $0x8] sm:$0xff]
    %v43 = vcombine.high %v39, %v39
    %v45 = vunpack.c.l.s4 1983009808
    %v46 = vunpack.c.0.s8 %v45
    %v47 = vlaneseq
    %v48 = vshrl.u32 %v47, 7
    %v49 = vsub.s32 %v46, %v48
    %v50 = vrot.slane %v39, %v49
    %v52 = vunpack.c.l.s4 1983009808
    %v53 = vunpack.c.0.s8 %v52
    %v54 = vlaneseq
    %v55 = vshrl.u32 %v54, 7
    %v56 = vsub.s32 %v53, %v55
    %v57 = vrot.slane %v43, %v56
    %v58 = vcombine.high %v50, %v50
    %v59 = vcombine.high %v57, %v57
    %v60 = vcombine.high %v40, %v40
    %v62 = vunpack.c.l.s4 1983009808
    %v63 = vunpack.c.0.s8 %v62
    %v64 = vlaneseq
    %v65 = vshrl.u32 %v64, 7
    %v66 = vsub.s32 %v63, %v65
    %v67 = vrot.slane %v40, %v66
    %v69 = vunpack.c.l.s4 1983009808
    %v70 = vunpack.c.0.s8 %v69
    %v71 = vlaneseq
    %v72 = vshrl.u32 %v71, 7
    %v73 = vsub.s32 %v70, %v72
    %v74 = vrot.slane %v60, %v73
    %v75 = vcombine.high %v67, %v67
    %v76 = vcombine.high %v74, %v74
    %v85 = vpack.c.bf16 %v50, %v50
    %v86 = vpack.c.bf16 %v58, %v58
    %v87 = vpack.c.bf16 %v57, %v57
    %v88 = vpack.c.bf16 %v59, %v59
    %v89 = vpack.c.bf16 %v67, %v67
    %v90 = vpack.c.bf16 %v75, %v75
    %v91 = vpack.c.bf16 %v74, %v74
    %v92 = vpack.c.bf16 %v76, %v76
    %v93 = vld [vmem:[#allocation2] sm:$0xf]
    %v94 = vld [vmem:[#allocation2 + $0x4] sm:$0xf]
    %v95 = vld [vmem:[#allocation2 + $0x8] sm:$0xf]
    %v96 = vld [vmem:[#allocation2 + $0xc] sm:$0xf]
    %v97 = vld [vmem:[#allocation2 + $0x10] sm:$0xf]
    %v98 = vld [vmem:[#allocation2 + $0x14] sm:$0xf]
    %v99 = vld [vmem:[#allocation2 + $0x18] sm:$0xf]
    %v100 = vld [vmem:[#allocation2 + $0x1c] sm:$0xf]
    %v101 = vld [vmem:[#allocation2 + $0x20] sm:$0xf]
    %v102 = vld [vmem:[#allocation2 + $0x24] sm:$0xf]
    %v103 = vld [vmem:[#allocation2 + $0x28] sm:$0xf]
    %v104 = vld [vmem:[#allocation2 + $0x2c] sm:$0xf]
    %v105 = vld [vmem:[#allocation2 + $0x30] sm:$0xf]
    %v106 = vld [vmem:[#allocation2 + $0x34] sm:$0xf]
    %v107 = vld [vmem:[#allocation2 + $0x38] sm:$0xf]
    %v108 = vld [vmem:[#allocation2 + $0x3c] sm:$0xf]
    %v109 = vld [vmem:[#allocation2 + $0x40] sm:$0xf]
    %v110 = vld [vmem:[#allocation2 + $0x44] sm:$0xf]
    %v111 = vld [vmem:[#allocation2 + $0x48] sm:$0xf]
    %v112 = vld [vmem:[#allocation2 + $0x4c] sm:$0xf]
    %v113 = vld [vmem:[#allocation2 + $0x50] sm:$0xf]
    %v114 = vld [vmem:[#allocation2 + $0x54] sm:$0xf]
    %v115 = vld [vmem:[#allocation2 + $0x58] sm:$0xf]
    %v116 = vld [vmem:[#allocation2 + $0x5c] sm:$0xf]
    %v117 = vld [vmem:[#allocation2 + $0x60] sm:$0xf]
    %v118 = vld [vmem:[#allocation2 + $0x64] sm:$0xf]
    %v119 = vld [vmem:[#allocation2 + $0x68] sm:$0xf]
    %v120 = vld [vmem:[#allocation2 + $0x6c] sm:$0xf]
    %v121 = vld [vmem:[#allocation2 + $0x70] sm:$0xf]
    %v122 = vld [vmem:[#allocation2 + $0x74] sm:$0xf]
    %v123 = vld [vmem:[#allocation2 + $0x78] sm:$0xf]
    %v124 = vld [vmem:[#allocation2 + $0x7c] sm:$0xf]
    %v125 = vld [vmem:[#allocation2 + $0x80] sm:$0xf]
    %v126 = vld [vmem:[#allocation2 + $0x84] sm:$0xf]
    %v127 = vld [vmem:[#allocation2 + $0x88] sm:$0xf]
    %v128 = vld [vmem:[#allocation2 + $0x8c] sm:$0xf]
    %v129 = vld [vmem:[#allocation2 + $0x90] sm:$0xf]
    %v130 = vld [vmem:[#allocation2 + $0x94] sm:$0xf]
    %v131 = vld [vmem:[#allocation2 + $0x98] sm:$0xf]
    %v132 = vld [vmem:[#allocation2 + $0x9c] sm:$0xf]
    %v133 = vld [vmem:[#allocation2 + $0xa0] sm:$0xf]
    %v134 = vld [vmem:[#allocation2 + $0xa4] sm:$0xf]
    %v135 = vld [vmem:[#allocation2 + $0xa8] sm:$0xf]
    %v136 = vld [vmem:[#allocation2 + $0xac] sm:$0xf]
    %v137 = vld [vmem:[#allocation2 + $0xb0] sm:$0xf]
    %v138 = vld [vmem:[#allocation2 + $0xb4] sm:$0xf]
    %v139 = vld [vmem:[#allocation2 + $0xb8] sm:$0xf]
    %v140 = vld [vmem:[#allocation2 + $0xbc] sm:$0xf]
    %v141 = vld [vmem:[#allocation2 + $0xc0] sm:$0xf]
    %v142 = vld [vmem:[#allocation2 + $0xc4] sm:$0xf]
    %v143 = vld [vmem:[#allocation2 + $0xc8] sm:$0xf]
    %v144 = vld [vmem:[#allocation2 + $0xcc] sm:$0xf]
    %v145 = vld [vmem:[#allocation2 + $0xd0] sm:$0xf]
    %v146 = vld [vmem:[#allocation2 + $0xd4] sm:$0xf]
    %v147 = vld [vmem:[#allocation2 + $0xd8] sm:$0xf]
    %v148 = vld [vmem:[#allocation2 + $0xdc] sm:$0xf]
    %v149 = vld [vmem:[#allocation2 + $0xe0] sm:$0xf]
    %v150 = vld [vmem:[#allocation2 + $0xe4] sm:$0xf]
    %v151 = vld [vmem:[#allocation2 + $0xe8] sm:$0xf]
    %v152 = vld [vmem:[#allocation2 + $0xec] sm:$0xf]
    %v153 = vld [vmem:[#allocation2 + $0xf0] sm:$0xf]
    %v154 = vld [vmem:[#allocation2 + $0xf4] sm:$0xf]
    %v155 = vld [vmem:[#allocation2 + $0xf8] sm:$0xf]
    %v156 = vld [vmem:[#allocation2 + $0xfc] sm:$0xf]
    %v157 = vld [vmem:[#allocation2 + $0x100] sm:$0xf]
    %v158 = vld [vmem:[#allocation2 + $0x104] sm:$0xf]
    %v159 = vld [vmem:[#allocation2 + $0x108] sm:$0xf]
    %v160 = vld [vmem:[#allocation2 + $0x10c] sm:$0xf]
    %v161 = vld [vmem:[#allocation2 + $0x110] sm:$0xf]
    %v162 = vld [vmem:[#allocation2 + $0x114] sm:$0xf]
    %v163 = vld [vmem:[#allocation2 + $0x118] sm:$0xf]
    %v164 = vld [vmem:[#allocation2 + $0x11c] sm:$0xf]
    %v165 = vld [vmem:[#allocation2 + $0x120] sm:$0xf]
    %v166 = vld [vmem:[#allocation2 + $0x124] sm:$0xf]
    %v167 = vld [vmem:[#allocation2 + $0x128] sm:$0xf]
    %v168 = vld [vmem:[#allocation2 + $0x12c] sm:$0xf]
    %v169 = vld [vmem:[#allocation2 + $0x130] sm:$0xf]
    %v170 = vld [vmem:[#allocation2 + $0x134] sm:$0xf]
    %v171 = vld [vmem:[#allocation2 + $0x138] sm:$0xf]
    %v172 = vld [vmem:[#allocation2 + $0x13c] sm:$0xf]
    %v173 = vld [vmem:[#allocation2 + $0x140] sm:$0xf]
    %v174 = vld [vmem:[#allocation2 + $0x144] sm:$0xf]
    %v175 = vld [vmem:[#allocation2 + $0x148] sm:$0xf]
    %v176 = vld [vmem:[#allocation2 + $0x14c] sm:$0xf]
    %v177 = vld [vmem:[#allocation2 + $0x150] sm:$0xf]
    %v178 = vld [vmem:[#allocation2 + $0x154] sm:$0xf]
    %v179 = vld [vmem:[#allocation2 + $0x158] sm:$0xf]
    %v180 = vld [vmem:[#allocation2 + $0x15c] sm:$0xf]
    %v181 = vld [vmem:[#allocation2 + $0x160] sm:$0xf]
    %v182 = vld [vmem:[#allocation2 + $0x164] sm:$0xf]
    %v183 = vld [vmem:[#allocation2 + $0x168] sm:$0xf]
    %v184 = vld [vmem:[#allocation2 + $0x16c] sm:$0xf]
    %v185 = vld [vmem:[#allocation2 + $0x170] sm:$0xf]
    %v186 = vld [vmem:[#allocation2 + $0x174] sm:$0xf]
    %v187 = vld [vmem:[#allocation2 + $0x178] sm:$0xf]
    %v188 = vld [vmem:[#allocation2 + $0x17c] sm:$0xf]
    %v189 = vld [vmem:[#allocation2 + $0x180] sm:$0xf]
    %v190 = vld [vmem:[#allocation2 + $0x184] sm:$0xf]
    %v191 = vld [vmem:[#allocation2 + $0x188] sm:$0xf]
    %v192 = vld [vmem:[#allocation2 + $0x18c] sm:$0xf]
    %v193 = vld [vmem:[#allocation2 + $0x190] sm:$0xf]
    %v194 = vld [vmem:[#allocation2 + $0x194] sm:$0xf]
    %v195 = vld [vmem:[#allocation2 + $0x198] sm:$0xf]
    %v196 = vld [vmem:[#allocation2 + $0x19c] sm:$0xf]
    %v197 = vld [vmem:[#allocation2 + $0x1a0] sm:$0xf]
    %v198 = vld [vmem:[#allocation2 + $0x1a4] sm:$0xf]
    %v199 = vld [vmem:[#allocation2 + $0x1a8] sm:$0xf]
    %v200 = vld [vmem:[#allocation2 + $0x1ac] sm:$0xf]
    %v201 = vld [vmem:[#allocation2 + $0x1b0] sm:$0xf]
    %v202 = vld [vmem:[#allocation2 + $0x1b4] sm:$0xf]
    %v203 = vld [vmem:[#allocation2 + $0x1b8] sm:$0xf]
    %v204 = vld [vmem:[#allocation2 + $0x1bc] sm:$0xf]
    %v205 = vld [vmem:[#allocation2 + $0x1c0] sm:$0xf]
    %v206 = vld [vmem:[#allocation2 + $0x1c4] sm:$0xf]
    %v207 = vld [vmem:[#allocation2 + $0x1c8] sm:$0xf]
    %v208 = vld [vmem:[#allocation2 + $0x1cc] sm:$0xf]
    %v209 = vld [vmem:[#allocation2 + $0x1d0] sm:$0xf]
    %v210 = vld [vmem:[#allocation2 + $0x1d4] sm:$0xf]
    %v211 = vld [vmem:[#allocation2 + $0x1d8] sm:$0xf]
    %v212 = vld [vmem:[#allocation2 + $0x1dc] sm:$0xf]
    %v213 = vld [vmem:[#allocation2 + $0x1e0] sm:$0xf]
    %v214 = vld [vmem:[#allocation2 + $0x1e4] sm:$0xf]
    %v215 = vld [vmem:[#allocation2 + $0x1e8] sm:$0xf]
    %v216 = vld [vmem:[#allocation2 + $0x1ec] sm:$0xf]
    %v217 = vld [vmem:[#allocation2 + $0x1f0] sm:$0xf]
    %v218 = vld [vmem:[#allocation2 + $0x1f4] sm:$0xf]
    %v219 = vld [vmem:[#allocation2 + $0x1f8] sm:$0xf]
    %v220 = vld [vmem:[#allocation2 + $0x1fc] sm:$0xf]
    %v221 = vld [vmem:[%s2] sm:$0x1]
    %v223 = vlaneseq
    %v224 = vshrl.u32 %v223, 7
    %v225 = vsub.s32 0, %v224
    %v226 = vrot.slane %v221, %v225
    %v356 = vunpack.c.l.b16 %v93
    %v357 = vunpack.c.l.b16 %v94
    %v358 = vunpack.c.l.b16 %v95
    %v359 = vunpack.c.l.b16 %v96
    %v360 = vunpack.c.l.b16 %v97
    %v361 = vunpack.c.l.b16 %v98
    %v362 = vunpack.c.l.b16 %v99
    %v363 = vunpack.c.l.b16 %v100
    %v364 = vunpack.c.l.b16 %v101
    %v365 = vunpack.c.l.b16 %v102
    %v366 = vunpack.c.l.b16 %v103
    %v367 = vunpack.c.l.b16 %v104
    %v368 = vunpack.c.l.b16 %v105
    %v369 = vunpack.c.l.b16 %v106
    %v370 = vunpack.c.l.b16 %v107
    %v371 = vunpack.c.l.b16 %v108
    %v372 = vunpack.c.l.b16 %v109
    %v373 = vunpack.c.l.b16 %v110
    %v374 = vunpack.c.l.b16 %v111
    %v375 = vunpack.c.l.b16 %v112
    %v376 = vunpack.c.l.b16 %v113
    %v377 = vunpack.c.l.b16 %v114
    %v378 = vunpack.c.l.b16 %v115
    %v379 = vunpack.c.l.b16 %v116
    %v380 = vunpack.c.l.b16 %v117
    %v381 = vunpack.c.l.b16 %v118
    %v382 = vunpack.c.l.b16 %v119
    %v383 = vunpack.c.l.b16 %v120
    %v384 = vunpack.c.l.b16 %v121
    %v385 = vunpack.c.l.b16 %v122
    %v386 = vunpack.c.l.b16 %v123
    %v387 = vunpack.c.l.b16 %v124
    %v388 = vunpack.c.l.b16 %v125
    %v389 = vunpack.c.l.b16 %v126
    %v390 = vunpack.c.l.b16 %v127
    %v391 = vunpack.c.l.b16 %v128
    %v392 = vunpack.c.l.b16 %v129
    %v393 = vunpack.c.l.b16 %v130
    %v394 = vunpack.c.l.b16 %v131
    %v395 = vunpack.c.l.b16 %v132
    %v396 = vunpack.c.l.b16 %v133
    %v397 = vunpack.c.l.b16 %v134
    %v398 = vunpack.c.l.b16 %v135
    %v399 = vunpack.c.l.b16 %v136
    %v400 = vunpack.c.l.b16 %v137
    %v401 = vunpack.c.l.b16 %v138
    %v402 = vunpack.c.l.b16 %v139
    %v403 = vunpack.c.l.b16 %v140
    %v404 = vunpack.c.l.b16 %v141
    %v405 = vunpack.c.l.b16 %v142
    %v406 = vunpack.c.l.b16 %v143
    %v407 = vunpack.c.l.b16 %v144
    %v408 = vunpack.c.l.b16 %v145
    %v409 = vunpack.c.l.b16 %v146
    %v410 = vunpack.c.l.b16 %v147
    %v411 = vunpack.c.l.b16 %v148
    %v412 = vunpack.c.l.b16 %v149
    %v413 = vunpack.c.l.b16 %v150
    %v414 = vunpack.c.l.b16 %v151
    %v415 = vunpack.c.l.b16 %v152
    %v416 = vunpack.c.l.b16 %v153
    %v417 = vunpack.c.l.b16 %v154
    %v418 = vunpack.c.l.b16 %v155
    %v419 = vunpack.c.l.b16 %v156
    %v420 = vunpack.c.l.b16 %v157
    %v421 = vunpack.c.l.b16 %v158
    %v422 = vunpack.c.l.b16 %v159
    %v423 = vunpack.c.l.b16 %v160
    %v424 = vunpack.c.l.b16 %v161
    %v425 = vunpack.c.l.b16 %v162
    %v426 = vunpack.c.l.b16 %v163
    %v427 = vunpack.c.l.b16 %v164
    %v428 = vunpack.c.l.b16 %v165
    %v429 = vunpack.c.l.b16 %v166
    %v430 = vunpack.c.l.b16 %v167
    %v431 = vunpack.c.l.b16 %v168
    %v432 = vunpack.c.l.b16 %v169
    %v433 = vunpack.c.l.b16 %v170
    %v434 = vunpack.c.l.b16 %v171
    %v435 = vunpack.c.l.b16 %v172
    %v436 = vunpack.c.l.b16 %v173
    %v437 = vunpack.c.l.b16 %v174
    %v438 = vunpack.c.l.b16 %v175
    %v439 = vunpack.c.l.b16 %v176
    %v440 = vunpack.c.l.b16 %v177
    %v441 = vunpack.c.l.b16 %v178
    %v442 = vunpack.c.l.b16 %v179
    %v443 = vunpack.c.l.b16 %v180
    %v444 = vunpack.c.l.b16 %v181
    %v445 = vunpack.c.l.b16 %v182
    %v446 = vunpack.c.l.b16 %v183
    %v447 = vunpack.c.l.b16 %v184
    %v448 = vunpack.c.l.b16 %v185
    %v449 = vunpack.c.l.b16 %v186
    %v450 = vunpack.c.l.b16 %v187
    %v451 = vunpack.c.l.b16 %v188
    %v452 = vunpack.c.l.b16 %v189
    %v453 = vunpack.c.l.b16 %v190
    %v454 = vunpack.c.l.b16 %v191
    %v455 = vunpack.c.l.b16 %v192
    %v456 = vunpack.c.l.b16 %v193
    %v457 = vunpack.c.l.b16 %v194
    %v458 = vunpack.c.l.b16 %v195
    %v459 = vunpack.c.l.b16 %v196
    %v460 = vunpack.c.l.b16 %v197
    %v461 = vunpack.c.l.b16 %v198
    %v462 = vunpack.c.l.b16 %v199
    %v463 = vunpack.c.l.b16 %v200
    %v464 = vunpack.c.l.b16 %v201
    %v465 = vunpack.c.l.b16 %v202
    %v466 = vunpack.c.l.b16 %v203
    %v467 = vunpack.c.l.b16 %v204
    %v468 = vunpack.c.l.b16 %v205
    %v469 = vunpack.c.l.b16 %v206
    %v470 = vunpack.c.l.b16 %v207
    %v471 = vunpack.c.l.b16 %v208
    %v472 = vunpack.c.l.b16 %v209
    %v473 = vunpack.c.l.b16 %v210
    %v474 = vunpack.c.l.b16 %v211
    %v475 = vunpack.c.l.b16 %v212
    %v476 = vunpack.c.l.b16 %v213
    %v477 = vunpack.c.l.b16 %v214
    %v478 = vunpack.c.l.b16 %v215
    %v479 = vunpack.c.l.b16 %v216
    %v480 = vunpack.c.l.b16 %v217
    %v481 = vunpack.c.l.b16 %v218
    %v482 = vunpack.c.l.b16 %v219
    %v483 = vunpack.c.l.b16 %v220
    %v484 = vpack.c.b16 %v357, %v356
    %v485 = vpack.c.b16 %v359, %v358
    %v486 = vpack.c.b16 %v361, %v360
    %v487 = vpack.c.b16 %v363, %v362
    %v488 = vpack.c.b16 %v365, %v364
    %v489 = vpack.c.b16 %v367, %v366
    %v490 = vpack.c.b16 %v369, %v368
    %v491 = vpack.c.b16 %v371, %v370
    %v492 = vpack.c.b16 %v373, %v372
    %v493 = vpack.c.b16 %v375, %v374
    %v494 = vpack.c.b16 %v377, %v376
    %v495 = vpack.c.b16 %v379, %v378
    %v496 = vpack.c.b16 %v381, %v380
    %v497 = vpack.c.b16 %v383, %v382
    %v498 = vpack.c.b16 %v385, %v384
    %v499 = vpack.c.b16 %v387, %v386
    %v500 = vpack.c.b16 %v389, %v388
    %v501 = vpack.c.b16 %v391, %v390
    %v502 = vpack.c.b16 %v393, %v392
    %v503 = vpack.c.b16 %v395, %v394
    %v504 = vpack.c.b16 %v397, %v396
    %v505 = vpack.c.b16 %v399, %v398
    %v506 = vpack.c.b16 %v401, %v400
    %v507 = vpack.c.b16 %v403, %v402
    %v508 = vpack.c.b16 %v405, %v404
    %v509 = vpack.c.b16 %v407, %v406
    %v510 = vpack.c.b16 %v409, %v408
    %v511 = vpack.c.b16 %v411, %v410
    %v512 = vpack.c.b16 %v413, %v412
    %v513 = vpack.c.b16 %v415, %v414
    %v514 = vpack.c.b16 %v417, %v416
    %v515 = vpack.c.b16 %v419, %v418
    %v516 = vpack.c.b16 %v421, %v420
    %v517 = vpack.c.b16 %v423, %v422
    %v518 = vpack.c.b16 %v425, %v424
    %v519 = vpack.c.b16 %v427, %v426
    %v520 = vpack.c.b16 %v429, %v428
    %v521 = vpack.c.b16 %v431, %v430
    %v522 = vpack.c.b16 %v433, %v432
    %v523 = vpack.c.b16 %v435, %v434
    %v524 = vpack.c.b16 %v437, %v436
    %v525 = vpack.c.b16 %v439, %v438
    %v526 = vpack.c.b16 %v441, %v440
    %v527 = vpack.c.b16 %v443, %v442
    %v528 = vpack.c.b16 %v445, %v444
    %v529 = vpack.c.b16 %v447, %v446
    %v530 = vpack.c.b16 %v449, %v448
    %v531 = vpack.c.b16 %v451, %v450
    %v532 = vpack.c.b16 %v453, %v452
    %v533 = vpack.c.b16 %v455, %v454
    %v534 = vpack.c.b16 %v457, %v456
    %v535 = vpack.c.b16 %v459, %v458
    %v536 = vpack.c.b16 %v461, %v460
    %v537 = vpack.c.b16 %v463, %v462
    %v538 = vpack.c.b16 %v465, %v464
    %v539 = vpack.c.b16 %v467, %v466
    %v540 = vpack.c.b16 %v469, %v468
    %v541 = vpack.c.b16 %v471, %v470
    %v542 = vpack.c.b16 %v473, %v472
    %v543 = vpack.c.b16 %v475, %v474
    %v544 = vpack.c.b16 %v477, %v476
    %v545 = vpack.c.b16 %v479, %v478
    %v546 = vpack.c.b16 %v481, %v480
    %v547 = vpack.c.b16 %v483, %v482
    %612 = vmatprep.subr.bf16.mxu0 0
    %613 = vmatpush1.bf16.msra.mxu0 %v484
    %614 = vmatprep.subr.bf16.mxu0 0
    %615 = vmatpush1.bf16.msra.mxu0 %v485
    %616 = vmatprep.subr.bf16.mxu0 0
    %617 = vmatpush1.bf16.msra.mxu0 %v486
    %618 = vmatprep.subr.bf16.mxu0 0
    %619 = vmatpush1.bf16.msra.mxu0 %v487
    %620 = vmatprep.subr.bf16.mxu0 0
    %621 = vmatpush1.bf16.msra.mxu0 %v488
    %622 = vmatprep.subr.bf16.mxu0 0
    %623 = vmatpush1.bf16.msra.mxu0 %v489
    %624 = vmatprep.subr.bf16.mxu0 0
    %625 = vmatpush1.bf16.msra.mxu0 %v490
    %626 = vmatprep.subr.bf16.mxu0 0
    %627 = vmatpush1.bf16.msra.mxu0 %v491
    %628 = vmatprep.subr.bf16.mxu0 0
    %629 = vmatpush1.bf16.msra.mxu0 %v492
    %630 = vmatprep.subr.bf16.mxu0 0
    %631 = vmatpush1.bf16.msra.mxu0 %v493
    %632 = vmatprep.subr.bf16.mxu0 0
    %633 = vmatpush1.bf16.msra.mxu0 %v494
    %634 = vmatprep.subr.bf16.mxu0 0
    %635 = vmatpush1.bf16.msra.mxu0 %v495
    %636 = vmatprep.subr.bf16.mxu0 0
    %637 = vmatpush1.bf16.msra.mxu0 %v496
    %638 = vmatprep.subr.bf16.mxu0 0
    %639 = vmatpush1.bf16.msra.mxu0 %v497
    %640 = vmatprep.subr.bf16.mxu0 0
    %641 = vmatpush1.bf16.msra.mxu0 %v498
    %642 = vmatprep.subr.bf16.mxu0 0
    %643 = vmatpush1.bf16.msra.mxu0 %v499
    %644 = vmatprep.mubr.bf16.mxu0 %v86
    %645 = vmatmul.mubr.bf16.gmra.mrb[0].mxu0 %v85
    %v646 = vpop.f32.mrb[0].mxu0
    %v647 = vadd.f32 %v226, %v646
    %v648 = vpop.f32.mrb[0].mxu0
    %v649 = vpop.f32.mrb[0].mxu0
    %v650 = vpop.f32.mrb[0].mxu0
    %651 = vdwg.mxu0
    %652 = vmatprep.subr.bf16.mxu0 0
    %653 = vmatpush1.bf16.msra.mxu0 %v500
    %654 = vmatprep.subr.bf16.mxu0 0
    %655 = vmatpush1.bf16.msra.mxu0 %v501
    %656 = vmatprep.subr.bf16.mxu0 0
    %657 = vmatpush1.bf16.msra.mxu0 %v502
    %658 = vmatprep.subr.bf16.mxu0 0
    %659 = vmatpush1.bf16.msra.mxu0 %v503
    %660 = vmatprep.subr.bf16.mxu0 0
    %661 = vmatpush1.bf16.msra.mxu0 %v504
    %662 = vmatprep.subr.bf16.mxu0 0
    %663 = vmatpush1.bf16.msra.mxu0 %v505
    %664 = vmatprep.subr.bf16.mxu0 0
    %665 = vmatpush1.bf16.msra.mxu0 %v506
    %666 = vmatprep.subr.bf16.mxu0 0
    %667 = vmatpush1.bf16.msra.mxu0 %v507
    %668 = vmatprep.subr.bf16.mxu0 0
    %669 = vmatpush1.bf16.msra.mxu0 %v508
    %670 = vmatprep.subr.bf16.mxu0 0
    %671 = vmatpush1.bf16.msra.mxu0 %v509
    %672 = vmatprep.subr.bf16.mxu0 0
    %673 = vmatpush1.bf16.msra.mxu0 %v510
    %674 = vmatprep.subr.bf16.mxu0 0
    %675 = vmatpush1.bf16.msra.mxu0 %v511
    %676 = vmatprep.subr.bf16.mxu0 0
    %677 = vmatpush1.bf16.msra.mxu0 %v512
    %678 = vmatprep.subr.bf16.mxu0 0
    %679 = vmatpush1.bf16.msra.mxu0 %v513
    %680 = vmatprep.subr.bf16.mxu0 0
    %681 = vmatpush1.bf16.msra.mxu0 %v514
    %682 = vmatprep.subr.bf16.mxu0 0
    %683 = vmatpush1.bf16.msra.mxu0 %v515
    %684 = vmatprep.mubr.bf16.mxu0 %v88
    %685 = vmatmul.mubr.bf16.gmra.mrb[0].mxu0 %v87
    %v686 = vpop.f32.mrb[0].mxu0
    %v687 = vadd.f32 %v647, %v686
    %v688 = vpop.f32.mrb[0].mxu0
    %v689 = vpop.f32.mrb[0].mxu0
    %v690 = vpop.f32.mrb[0].mxu0
    %691 = vdwg.mxu0
    %692 = vmatprep.subr.bf16.mxu0 0
    %693 = vmatpush1.bf16.msra.mxu0 %v516
    %694 = vmatprep.subr.bf16.mxu0 0
    %695 = vmatpush1.bf16.msra.mxu0 %v517
    %696 = vmatprep.subr.bf16.mxu0 0
    %697 = vmatpush1.bf16.msra.mxu0 %v518
    %698 = vmatprep.subr.bf16.mxu0 0
    %699 = vmatpush1.bf16.msra.mxu0 %v519
    %700 = vmatprep.subr.bf16.mxu0 0
    %701 = vmatpush1.bf16.msra.mxu0 %v520
    %702 = vmatprep.subr.bf16.mxu0 0
    %703 = vmatpush1.bf16.msra.mxu0 %v521
    %704 = vmatprep.subr.bf16.mxu0 0
    %705 = vmatpush1.bf16.msra.mxu0 %v522
    %706 = vmatprep.subr.bf16.mxu0 0
    %707 = vmatpush1.bf16.msra.mxu0 %v523
    %708 = vmatprep.subr.bf16.mxu0 0
    %709 = vmatpush1.bf16.msra.mxu0 %v524
    %710 = vmatprep.subr.bf16.mxu0 0
    %711 = vmatpush1.bf16.msra.mxu0 %v525
    %712 = vmatprep.subr.bf16.mxu0 0
    %713 = vmatpush1.bf16.msra.mxu0 %v526
    %714 = vmatprep.subr.bf16.mxu0 0
    %715 = vmatpush1.bf16.msra.mxu0 %v527
    %716 = vmatprep.subr.bf16.mxu0 0
    %717 = vmatpush1.bf16.msra.mxu0 %v528
    %718 = vmatprep.subr.bf16.mxu0 0
    %719 = vmatpush1.bf16.msra.mxu0 %v529
    %720 = vmatprep.subr.bf16.mxu0 0
    %721 = vmatpush1.bf16.msra.mxu0 %v530
    %722 = vmatprep.subr.bf16.mxu0 0
    %723 = vmatpush1.bf16.msra.mxu0 %v531
    %724 = vmatprep.mubr.bf16.mxu0 %v90
    %725 = vmatmul.mubr.bf16.gmra.mrb[0].mxu0 %v89
    %v726 = vpop.f32.mrb[0].mxu0
    %v727 = vadd.f32 %v687, %v726
    %v728 = vpop.f32.mrb[0].mxu0
    %v729 = vpop.f32.mrb[0].mxu0
    %v730 = vpop.f32.mrb[0].mxu0
    %731 = vdwg.mxu0
    %732 = vmatprep.subr.bf16.mxu0 0
    %733 = vmatpush1.bf16.msra.mxu0 %v532
    %734 = vmatprep.subr.bf16.mxu0 0
    %735 = vmatpush1.bf16.msra.mxu0 %v533
    %736 = vmatprep.subr.bf16.mxu0 0
    %737 = vmatpush1.bf16.msra.mxu0 %v534
    %738 = vmatprep.subr.bf16.mxu0 0
    %739 = vmatpush1.bf16.msra.mxu0 %v535
    %740 = vmatprep.subr.bf16.mxu0 0
    %741 = vmatpush1.bf16.msra.mxu0 %v536
    %742 = vmatprep.subr.bf16.mxu0 0
    %743 = vmatpush1.bf16.msra.mxu0 %v537
    %744 = vmatprep.subr.bf16.mxu0 0
    %745 = vmatpush1.bf16.msra.mxu0 %v538
    %746 = vmatprep.subr.bf16.mxu0 0
    %747 = vmatpush1.bf16.msra.mxu0 %v539
    %748 = vmatprep.subr.bf16.mxu0 0
    %749 = vmatpush1.bf16.msra.mxu0 %v540
    %750 = vmatprep.subr.bf16.mxu0 0
    %751 = vmatpush1.bf16.msra.mxu0 %v541
    %752 = vmatprep.subr.bf16.mxu0 0
    %753 = vmatpush1.bf16.msra.mxu0 %v542
    %754 = vmatprep.subr.bf16.mxu0 0
    %755 = vmatpush1.bf16.msra.mxu0 %v543
    %756 = vmatprep.subr.bf16.mxu0 0
    %757 = vmatpush1.bf16.msra.mxu0 %v544
    %758 = vmatprep.subr.bf16.mxu0 0
    %759 = vmatpush1.bf16.msra.mxu0 %v545
    %760 = vmatprep.subr.bf16.mxu0 0
    %761 = vmatpush1.bf16.msra.mxu0 %v546
    %762 = vmatprep.subr.bf16.mxu0 0
    %763 = vmatpush1.bf16.msra.mxu0 %v547
    %764 = vmatprep.mubr.bf16.mxu0 %v92
    %765 = vmatmul.mubr.bf16.gmra.mrb[0].mxu0 %v91
    %v766 = vpop.f32.mrb[0].mxu0
    %v767 = vadd.f32 %v727, %v766
    %v768 = vpop.f32.mrb[0].mxu0
    %v769 = vpop.f32.mrb[0].mxu0
    %v770 = vpop.f32.mrb[0].mxu0
    %771 = vdwg.mxu0
    %v772 = vld [vmem:[%s3] sm:$0xf]
    %v773 = vld [vmem:[%s3 + $0x4] sm:$0xf]
    %v774 = vld [vmem:[%s3 + $0x8] sm:$0xf]
    %v775 = vld [vmem:[%s3 + $0xc] sm:$0xf]
    %v776 = vld [vmem:[%s3 + $0x10] sm:$0xf]
    %v777 = vld [vmem:[%s3 + $0x14] sm:$0xf]
    %v778 = vld [vmem:[%s3 + $0x18] sm:$0xf]
    %v779 = vld [vmem:[%s3 + $0x1c] sm:$0xf]
    %v780 = vld [vmem:[%s3 + $0x20] sm:$0xf]
    %v781 = vld [vmem:[%s3 + $0x24] sm:$0xf]
    %v782 = vld [vmem:[%s3 + $0x28] sm:$0xf]
    %v783 = vld [vmem:[%s3 + $0x2c] sm:$0xf]
    %v784 = vld [vmem:[%s3 + $0x30] sm:$0xf]
    %v785 = vld [vmem:[%s3 + $0x34] sm:$0xf]
    %v786 = vld [vmem:[%s3 + $0x38] sm:$0xf]
    %v787 = vld [vmem:[%s3 + $0x3c] sm:$0xf]
    %v788 = vmax.f32 %v767, 0.0
    %v789 = vpack.c.bf16 %v788, %v788
    %v806 = vunpack.c.l.b16 %v772
    %v807 = vunpack.c.l.b16 %v773
    %v808 = vunpack.c.l.b16 %v774
    %v809 = vunpack.c.l.b16 %v775
    %v810 = vunpack.c.l.b16 %v776
    %v811 = vunpack.c.l.b16 %v777
    %v812 = vunpack.c.l.b16 %v778
    %v813 = vunpack.c.l.b16 %v779
    %v814 = vunpack.c.l.b16 %v780
    %v815 = vunpack.c.l.b16 %v781
    %v816 = vunpack.c.l.b16 %v782
    %v817 = vunpack.c.l.b16 %v783
    %v818 = vunpack.c.l.b16 %v784
    %v819 = vunpack.c.l.b16 %v785
    %v820 = vunpack.c.l.b16 %v786
    %v821 = vunpack.c.l.b16 %v787
    %v822 = vpack.c.b16 %v807, %v806
    %v823 = vpack.c.b16 %v809, %v808
    %v824 = vpack.c.b16 %v811, %v810
    %v825 = vpack.c.b16 %v813, %v812
    %v826 = vpack.c.b16 %v815, %v814
    %v827 = vpack.c.b16 %v817, %v816
    %v828 = vpack.c.b16 %v819, %v818
    %v829 = vpack.c.b16 %v821, %v820
    %838 = vmatprep.subr.bf16.mxu0 0
    %839 = vmatpush1.bf16.msra.mxu0 %v822
    %840 = vmatprep.subr.bf16.mxu0 0
    %841 = vmatpush1.bf16.msra.mxu0 %v823
    %842 = vmatprep.subr.bf16.mxu0 0
    %843 = vmatpush1.bf16.msra.mxu0 %v824
    %844 = vmatprep.subr.bf16.mxu0 0
    %845 = vmatpush1.bf16.msra.mxu0 %v825
    %846 = vmatprep.subr.bf16.mxu0 0
    %847 = vmatpush1.bf16.msra.mxu0 %v826
    %848 = vmatprep.subr.bf16.mxu0 0
    %849 = vmatpush1.bf16.msra.mxu0 %v827
    %850 = vmatprep.subr.bf16.mxu0 0
    %851 = vmatpush1.bf16.msra.mxu0 %v828
    %852 = vmatprep.subr.bf16.mxu0 0
    %853 = vmatpush1.bf16.msra.mxu0 %v829
    %854 = vmatprep.subr.bf16.mxu0 0
    %855 = vmatpush1.bf16.msra.mxu0 0
    %856 = vmatprep.subr.bf16.mxu0 0
    %857 = vmatpush1.bf16.msra.mxu0 0
    %858 = vmatprep.subr.bf16.mxu0 0
    %859 = vmatpush1.bf16.msra.mxu0 0
    %860 = vmatprep.subr.bf16.mxu0 0
    %861 = vmatpush1.bf16.msra.mxu0 0
    %862 = vmatprep.subr.bf16.mxu0 0
    %863 = vmatpush1.bf16.msra.mxu0 0
    %864 = vmatprep.subr.bf16.mxu0 0
    %865 = vmatpush1.bf16.msra.mxu0 0
    %866 = vmatprep.subr.bf16.mxu0 0
    %867 = vmatpush1.bf16.msra.mxu0 0
    %868 = vmatprep.subr.bf16.mxu0 0
    %869 = vmatpush1.bf16.msra.mxu0 0
    %870 = vmatprep.mubr.bf16.mxu0 0
    %871 = vmatmul.mubr.bf16.gmra.mrb[0].mxu0 %v789
    %v872 = vpop.f32.mrb[0].mxu0
    %v873 = vadd.f32 0.0, %v872
    %v874 = vpop.f32.mrb[0].mxu0
    %v875 = vpop.f32.mrb[0].mxu0
    %v876 = vpop.f32.mrb[0].mxu0
    %877 = vdwg.mxu0
    %v878 = vmax.f32 %v873, 0.0
    %v879 = vpack.c.bf16 %v878, %v878
    %v880 = vld [vmem:[%s4] sm:$0xf]
    %v881 = vld [vmem:[%s4 + $0x4] sm:$0xf]
    %v882 = vld [vmem:[%s4 + $0x8] sm:$0xf]
    %v883 = vld [vmem:[%s4 + $0xc] sm:$0xf]
    %v884 = vld [vmem:[%s4 + $0x10] sm:$0xf]
    %v885 = vld [vmem:[%s4 + $0x14] sm:$0xf]
    %v886 = vld [vmem:[%s4 + $0x18] sm:$0xf]
    %v887 = vld [vmem:[%s4 + $0x1c] sm:$0xf]
    %v888 = vld [vmem:[%s4 + $0x20] sm:$0xf]
    %v889 = vld [vmem:[%s4 + $0x24] sm:$0xf]
    %v890 = vld [vmem:[%s4 + $0x28] sm:$0xf]
    %v891 = vld [vmem:[%s4 + $0x2c] sm:$0xf]
    %v892 = vld [vmem:[%s4 + $0x30] sm:$0xf]
    %v893 = vld [vmem:[%s4 + $0x34] sm:$0xf]
    %v894 = vld [vmem:[%s4 + $0x38] sm:$0xf]
    %v895 = vld [vmem:[%s4 + $0x3c] sm:$0xf]
    %v896 = vld [vmem:[%s5] sm:$0x1]
    %v898 = vlaneseq
    %v899 = vshrl.u32 %v898, 7
    %v900 = vsub.s32 0, %v899
    %v901 = vrot.slane %v896, %v900
    %v919 = vunpack.c.l.b16 %v880
    %v920 = vunpack.c.l.b16 %v881
    %v921 = vunpack.c.l.b16 %v882
    %v922 = vunpack.c.l.b16 %v883
    %v923 = vunpack.c.l.b16 %v884
    %v924 = vunpack.c.l.b16 %v885
    %v925 = vunpack.c.l.b16 %v886
    %v926 = vunpack.c.l.b16 %v887
    %v927 = vunpack.c.l.b16 %v888
    %v928 = vunpack.c.l.b16 %v889
    %v929 = vunpack.c.l.b16 %v890
    %v930 = vunpack.c.l.b16 %v891
    %v931 = vunpack.c.l.b16 %v892
    %v932 = vunpack.c.l.b16 %v893
    %v933 = vunpack.c.l.b16 %v894
    %v934 = vunpack.c.l.b16 %v895
    %v935 = vpack.c.b16 %v920, %v919
    %v936 = vpack.c.b16 %v922, %v921
    %v937 = vpack.c.b16 %v924, %v923
    %v938 = vpack.c.b16 %v926, %v925
    %v939 = vpack.c.b16 %v928, %v927
    %v940 = vpack.c.b16 %v930, %v929
    %v941 = vpack.c.b16 %v932, %v931
    %v942 = vpack.c.b16 %v934, %v933
    %951 = vmatprep.subr.bf16.mxu0 0
    %952 = vmatpush1.bf16.msra.mxu0 %v935
    %953 = vmatprep.subr.bf16.mxu0 0
    %954 = vmatpush1.bf16.msra.mxu0 %v936
    %955 = vmatprep.subr.bf16.mxu0 0
    %956 = vmatpush1.bf16.msra.mxu0 %v937
    %957 = vmatprep.subr.bf16.mxu0 0
    %958 = vmatpush1.bf16.msra.mxu0 %v938
    %959 = vmatprep.subr.bf16.mxu0 0
    %960 = vmatpush1.bf16.msra.mxu0 %v939
    %961 = vmatprep.subr.bf16.mxu0 0
    %962 = vmatpush1.bf16.msra.mxu0 %v940
    %963 = vmatprep.subr.bf16.mxu0 0
    %964 = vmatpush1.bf16.msra.mxu0 %v941
    %965 = vmatprep.subr.bf16.mxu0 0
    %966 = vmatpush1.bf16.msra.mxu0 %v942
    %967 = vmatprep.subr.bf16.mxu0 0
    %968 = vmatpush1.bf16.msra.mxu0 0
    %969 = vmatprep.subr.bf16.mxu0 0
    %970 = vmatpush1.bf16.msra.mxu0 0
    %971 = vmatprep.subr.bf16.mxu0 0
    %972 = vmatpush1.bf16.msra.mxu0 0
    %973 = vmatprep.subr.bf16.mxu0 0
    %974 = vmatpush1.bf16.msra.mxu0 0
    %975 = vmatprep.subr.bf16.mxu0 0
    %976 = vmatpush1.bf16.msra.mxu0 0
    %977 = vmatprep.subr.bf16.mxu0 0
    %978 = vmatpush1.bf16.msra.mxu0 0
    %979 = vmatprep.subr.bf16.mxu0 0
    %980 = vmatpush1.bf16.msra.mxu0 0
    %981 = vmatprep.subr.bf16.mxu0 0
    %982 = vmatpush1.bf16.msra.mxu0 0
    %983 = vmatprep.mubr.bf16.mxu0 0
    %984 = vmatmul.mubr.bf16.gmra.mrb[0].mxu0 %v879
    %v985 = vpop.f32.mrb[0].mxu0
    %v986 = vadd.f32 %v901, %v985
    %v987 = vpop.f32.mrb[0].mxu0
    %v988 = vpop.f32.mrb[0].mxu0
    %v989 = vpop.f32.mrb[0].mxu0
    %990 = vdwg.mxu0
    %991 = vst [vmem:[#allocation5] sm:$0x3] %v986
    // Predicated region
    $region30: #{basic_rnn_forward.1} parent=1 // pred_check
      _
    $region31: #{basic_rnn_forward.1} parent=1 // pred_check_branch
      %993 = sbr.rel (0) target = $region33
    $region32: #{basic_rnn_forward.1} parent=1 // pred_region
      %s995 = ssub.s32 32, 32
      %996 = vsyncadd [#allocation4], %s995
      %s998 = sshll.u32 [#allocation5], 4
      %s999 = int_to_ptr.vmem [resolvable:$true] %s998
      %1001 = dma.vmem_to_hbm [thread:$0]  %s999, 32, %s6, [#allocation4]
    $region33: #{basic_rnn_forward.1} parent=1 // pred_fallthru
      _
    // Predicated region
    $region34: #{basic_rnn_forward.1} parent=1 // pred_check
      _
    $region35: #{basic_rnn_forward.1} parent=1 // pred_check_branch
      %1003 = sbr.rel (0) target = $region37
    $region36: #{basic_rnn_forward.1} parent=1 // pred_region
      %1004 = dma.done [#allocation4], 32
    $region37: #{basic_rnn_forward.1} parent=1 // pred_fallthru
      _
    %1005 = vsyncpa [#allocation3], 1
    %1006 = vsyncpa [#allocation4], 1

</llo_original>
